<compile_context>
chip_gen: v7x
topology: tpu7x:2x2x1
jax: 0.10.0
libtpu: 0.0.40
codegen_flags: <defaults>
</compile_context>

<pallas_src>
import functools
import numpy as np
import jax
import jax.numpy as jnp
from jax.experimental import pallas as pl
from jax.experimental.pallas import tpu as pltpu


def _round_up(n, m):
    return ((n + m - 1) // m) * m


def _swish(h):
    # h * sigmoid(h).  exp and the approximate reciprocal both go to the EUP
    # slot, which is free in this VALU-bound kernel.
    return h * pl.reciprocal(1.0 + jnp.exp(-h), approx=True)


# --------------------------------------------------------------------------
# Pallas kernel: one batch tile (TB rows) of the full block.
# --------------------------------------------------------------------------
def _mlp_block_kernel(x_ref, c_ref, w1_ref, w2_ref, o_ref, *, use_residual):
    # c_ref rows: 0 = norm1 scale, 1 = norm1 shift,
    #             2 = folded bias1 (b1*s2 + shift2), 3 = bias2.
    x = x_ref[...].astype(jnp.float32)                       # (TB, F)

    # norm1 (folded per-feature affine) + Swish.
    # TODO(synk): on v6e/v7x this elementwise phase could run in bf16 (bf16
    # VALU/EUP, ~2x packed throughput); kept f32 so the same kernel is also
    # correct/fast on v5e (no bf16 VPU/EUP there).
    h = x * c_ref[0:1, :] + c_ref[1:2, :]
    h = _swish(h)

    # linear1 (norm2 folded into W1/b1): bf16 MXU inputs, f32 accumulation.
    h = jnp.dot(h.astype(jnp.bfloat16), w1_ref[...],
                preferred_element_type=jnp.float32) + c_ref[2:3, :]
    h = _swish(h)

    # linear2
    h = jnp.dot(h.astype(jnp.bfloat16), w2_ref[...],
                preferred_element_type=jnp.float32) + c_ref[3:4, :]

    if use_residual:
        # Re-read the input buffer at the point of use (short live range).
        h = h + x_ref[...].astype(jnp.float32)

    o_ref[...] = h.astype(o_ref.dtype)


# --------------------------------------------------------------------------
# Wrapper
# --------------------------------------------------------------------------
def mlp_temporal_encoder_block(x_in, params, *, use_residual=False, eps=1e-5,
                               row_tile=1024, activation_dtype=jnp.float32):
    """x_in: (bs, C, T). Returns (bs, C, T) in `activation_dtype`.

    activation_dtype=jnp.bfloat16 halves the streamed activation HBM bytes
    (useful on v5e where the kernel is HBM-bound); internal math stays f32
    with bf16 MXU inputs either way.
    """
    bs, C, T = x_in.shape
    F = C * T
    x2 = x_in.reshape(bs, F).astype(activation_dtype)

    # Fold eval-mode BatchNorm1d (running stats) into per-feature scale/shift.
    def fold_norm(p):
        scale_c = p["gamma"].astype(jnp.float32) / jnp.sqrt(
            p["var"].astype(jnp.float32) + eps)                         # (C,)
        shift_c = (p["beta"].astype(jnp.float32)
                   - p["mean"].astype(jnp.float32) * scale_c)           # (C,)
        # feature index f = c*T + t  -> repeat each channel value T times.
        return jnp.repeat(scale_c, T), jnp.repeat(shift_c, T)           # (F,)

    s1, t1 = fold_norm(params["norm1"])
    s2, t2 = fold_norm(params["norm2"])

    w1 = params["w1"].astype(jnp.float32)
    w2 = params["w2"].astype(jnp.float32)
    b1 = params["b1"].astype(jnp.float32)
    b2 = params["b2"].astype(jnp.float32)

    # Fold norm2 into linear1 (in f32, BEFORE the bf16 cast):
    #   norm2(x @ W1 + b1) = x @ (W1 * s2[None,:]) + (b1*s2 + t2)
    w1_folded = (w1 * s2[None, :]).astype(jnp.bfloat16)
    w2_bf = w2.astype(jnp.bfloat16)
    b1_folded = b1 * s2 + t2

    # Pack the per-feature constant vectors into one sublane-aligned block.
    cvec = jnp.zeros((8, F), jnp.float32)
    cvec = cvec.at[0].set(s1).at[1].set(t1).at[2].set(b1_folded).at[3].set(b2)

    # Row tile: as large as possible so typical batches run in ONE grid step
    # (each extra serial step costs ~0.35us on single-TC v5e/v6e).  Rounded
    # up to the (8,*) sublane constraint; Pallas masks the ragged last block,
    # so no jnp.pad / output-slice HBM copies are needed.
    TB = min(int(row_tile), _round_up(bs, 8))
    grid = (pl.cdiv(bs, TB),)

    const2d = lambda shape: pl.BlockSpec(shape, lambda r: (0, 0))  # VMEM-resident
    in_specs = [
        pl.BlockSpec((TB, F), lambda r: (r, 0)),   # streamed activations
        const2d((8, F)),                           # packed norm/bias vectors
        const2d((F, F)),                           # folded W1 (bf16)
        const2d((F, F)),                           # W2 (bf16)
    ]
    out_specs = pl.BlockSpec((TB, F), lambda r: (r, 0))
    out_shape = jax.ShapeDtypeStruct((bs, F), activation_dtype)

    # NOTE: weight blocks are double-buffered by default; if C*T grows large
    # (F >~ 2000 on v7x's 64 MiB VMEM), single-buffer them with
    # pipeline_mode=pl.Buffered(1) and/or tile the matmuls over K/N and set
    # vmem_limit_bytes explicitly.
    # TODO(synk): on v7x, pltpu.CORE_PARALLEL (or pl.core_map over a
    # TensorCore mesh) on the row axis would shard tiles across both
    # TensorCores; plain "parallel" is kept here for cross-generation safety.
    out = pl.pallas_call(
        functools.partial(_mlp_block_kernel, use_residual=use_residual),
        grid=grid,
        in_specs=in_specs,
        out_specs=out_specs,
        out_shape=out_shape,
        compiler_params=pltpu.CompilerParams(
            dimension_semantics=("parallel",)),
    )(x2, cvec, w1_folded, w2_bf)

    return out.reshape(bs, C, T)


# --------------------------------------------------------------------------
# Deterministic synthetic parameters (shapes match the PyTorch module).
# --------------------------------------------------------------------------
def init_params(key, *, n_channels, n_times):
    C, T = n_channels, n_times
    F = C * T
    ks = jax.random.split(key, 12)

    def u(k, shape, fan_in):
        return (jax.random.uniform(k, shape, jnp.float32, -1.0, 1.0)
                / np.sqrt(float(fan_in)))

    def norm_p(k0, k1, k2, k3):
        return {
            "gamma": 1.0 + 0.1 * jax.random.normal(k0, (C,), jnp.float32),
            "beta":  0.1 * jax.random.normal(k1, (C,), jnp.float32),
            "mean":  0.1 * jax.random.normal(k2, (C,), jnp.float32),
            "var":   jax.random.uniform(k3, (C,), jnp.float32, 0.5, 1.5),
        }

    return {
        "norm1": norm_p(ks[0], ks[1], ks[2], ks[3]),
        "norm2": norm_p(ks[4], ks[5], ks[6], ks[7]),
        # Weights stored (in_features, out_features): y = x @ w + b.
        # (PyTorch nn.Linear stores the transpose; real checkpoints need w.T.)
        "w1": u(ks[8], (F, F), F),  "b1": u(ks[9], (F,), F),
        "w2": u(ks[10], (F, F), F), "b2": u(ks[11], (F,), F),
    }


# --------------------------------------------------------------------------
# Pure NumPy (float64) reference of the PyTorch forward pass (eval mode).
# --------------------------------------------------------------------------
def reference_np(x, params, *, use_residual, eps=1e-5):
    xp = np.asarray(x, np.float64)
    bs, C, T = xp.shape
    F = C * T

    def norm(z, p):
        g = np.asarray(p["gamma"], np.float64)[None, :, None]
        b = np.asarray(p["beta"], np.float64)[None, :, None]
        m = np.asarray(p["mean"], np.float64)[None, :, None]
        v = np.asarray(p["var"], np.float64)[None, :, None]
        return (z - m) / np.sqrt(v + eps) * g + b

    def swish(z):
        return z / (1.0 + np.exp(-z))

    w1 = np.asarray(params["w1"], np.float64)
    b1 = np.asarray(params["b1"], np.float64)
    w2 = np.asarray(params["w2"], np.float64)
    b2 = np.asarray(params["b2"], np.float64)

    h = swish(norm(xp, params["norm1"]))
    h = (h.reshape(bs, F) @ w1 + b1).reshape(bs, C, T)
    h = swish(norm(h, params["norm2"]))
    h = (h.reshape(bs, F) @ w2 + b2).reshape(bs, C, T)
    if use_residual:
        h = h + xp
    return h


if __name__ == "__main__":
    # Small shapes consistent with the module (F = C*T = 128 keeps the lane
    # axis dense, matching the module's default n_channels=128, n_times=1).
    n_channels = 16
    n_times = 8
    bs = 16

    key = jax.random.PRNGKey(0)
    kx, kp = jax.random.split(key)
    x = jax.random.normal(kx, (bs, n_channels, n_times), jnp.float32)
    params = init_params(kp, n_channels=n_channels, n_times=n_times)

    for use_residual in (False, True):
        fn = jax.jit(functools.partial(mlp_temporal_encoder_block,
                                       params=params,
                                       use_residual=use_residual))
        out = jax.block_until_ready(fn(x))
        assert out.shape == (bs, n_channels, n_times)

        ref = reference_np(np.asarray(x), params, use_residual=use_residual)
        out_np = np.asarray(out, np.float64)
        assert np.all(np.isfinite(out_np))
        err = np.max(np.abs(out_np - ref))
        assert np.allclose(out_np, ref, atol=5e-2, rtol=5e-2), (
            f"mismatch (residual={use_residual}): max abs err {err}")

    print("KERNEL_OK")
</pallas_src>

<mosaic_0001>
module attributes {stable_mosaic.version = 11 : i64} {
  func.func @_mlp_block_kernel(%arg0: i32, %arg1: memref<16x128xf32, #tpu.memory_space<vmem>>, %arg2: memref<8x128xf32, #tpu.memory_space<vmem>>, %arg3: memref<128x128xbf16, #tpu.memory_space<vmem>>, %arg4: memref<128x128xbf16, #tpu.memory_space<vmem>>, %arg5: memref<16x128xf32, #tpu.memory_space<vmem>>) attributes {dimension_semantics = [#tpu.dimension_semantics<parallel>], iteration_bounds = array<i64: 1>, scalar_prefetch = 0 : i64, scratch_operands = 0 : i64, tpu.core_type = #tpu.core_type<tc>, window_params = [{transform_indices = @transform_0, window_bounds = array<i64: 16, 128>}, {pipeline_mode = #tpu.pipeline_mode<synchronous>, transform_indices = @transform_1, window_bounds = array<i64: 8, 128>}, {pipeline_mode = #tpu.pipeline_mode<synchronous>, transform_indices = @transform_2, window_bounds = array<i64: 128, 128>}, {pipeline_mode = #tpu.pipeline_mode<synchronous>, transform_indices = @transform_3, window_bounds = array<i64: 128, 128>}, {transform_indices = @transform_4, window_bounds = array<i64: 16, 128>}]} {
    %c0 = arith.constant 0 : index
    %c0_0 = arith.constant 0 : index
    %0 = vector.load %arg1[%c0, %c0_0] : memref<16x128xf32, #tpu.memory_space<vmem>>, vector<16x128xf32>
    %c0_1 = arith.constant 0 : index
    %c0_2 = arith.constant 0 : index
    %1 = vector.load %arg2[%c0_1, %c0_2] : memref<8x128xf32, #tpu.memory_space<vmem>>, vector<1x128xf32>
    %2 = vector.broadcast %1 : vector<1x128xf32> to vector<16x128xf32>
    %3 = arith.mulf %0, %2 : vector<16x128xf32>
    %c1 = arith.constant 1 : index
    %c0_3 = arith.constant 0 : index
    %4 = vector.load %arg2[%c1, %c0_3] : memref<8x128xf32, #tpu.memory_space<vmem>>, vector<1x128xf32>
    %5 = vector.broadcast %4 : vector<1x128xf32> to vector<16x128xf32>
    %6 = arith.addf %3, %5 : vector<16x128xf32>
    %cst = arith.constant 0.000000e+00 : f32
    %7 = vector.broadcast %cst : f32 to vector<16x128xf32>
    %8 = arith.subf %7, %6 : vector<16x128xf32>
    %9 = math.exp %8 : vector<16x128xf32>
    %cst_4 = arith.constant 1.000000e+00 : f32
    %10 = vector.broadcast %cst_4 : f32 to vector<16x128xf32>
    %11 = arith.addf %10, %9 : vector<16x128xf32>
    %12 = tpu.reciprocal %11 {approx = true} : vector<16x128xf32> -> vector<16x128xf32>
    %13 = arith.mulf %6, %12 : vector<16x128xf32>
    %14 = arith.truncf %13 : vector<16x128xf32> to vector<16x128xbf16>
    %c0_5 = arith.constant 0 : index
    %c0_6 = arith.constant 0 : index
    %15 = vector.load %arg3[%c0_5, %c0_6] : memref<128x128xbf16, #tpu.memory_space<vmem>>, vector<128x128xbf16>
    %cst_7 = arith.constant dense<0.000000e+00> : vector<16x128xf32>
    %16 = tpu.matmul %14, %15, %cst_7 {dimension_numbers = #tpu.dot_dimension_numbers<[1], [0], [0], [1], [0, 0, 1, 1], [], []>} : vector<16x128xbf16>, vector<128x128xbf16>, vector<16x128xf32> -> vector<16x128xf32>
    %c2 = arith.constant 2 : index
    %c0_8 = arith.constant 0 : index
    %17 = vector.load %arg2[%c2, %c0_8] : memref<8x128xf32, #tpu.memory_space<vmem>>, vector<1x128xf32>
    %18 = vector.broadcast %17 : vector<1x128xf32> to vector<16x128xf32>
    %19 = arith.addf %16, %18 : vector<16x128xf32>
    %cst_9 = arith.constant 0.000000e+00 : f32
    %20 = vector.broadcast %cst_9 : f32 to vector<16x128xf32>
    %21 = arith.subf %20, %19 : vector<16x128xf32>
    %22 = math.exp %21 : vector<16x128xf32>
    %cst_10 = arith.constant 1.000000e+00 : f32
    %23 = vector.broadcast %cst_10 : f32 to vector<16x128xf32>
    %24 = arith.addf %23, %22 : vector<16x128xf32>
    %25 = tpu.reciprocal %24 {approx = true} : vector<16x128xf32> -> vector<16x128xf32>
    %26 = arith.mulf %19, %25 : vector<16x128xf32>
    %27 = arith.truncf %26 : vector<16x128xf32> to vector<16x128xbf16>
    %c0_11 = arith.constant 0 : index
    %c0_12 = arith.constant 0 : index
    %28 = vector.load %arg4[%c0_11, %c0_12] : memref<128x128xbf16, #tpu.memory_space<vmem>>, vector<128x128xbf16>
    %cst_13 = arith.constant dense<0.000000e+00> : vector<16x128xf32>
    %29 = tpu.matmul %27, %28, %cst_13 {dimension_numbers = #tpu.dot_dimension_numbers<[1], [0], [0], [1], [0, 0, 1, 1], [], []>} : vector<16x128xbf16>, vector<128x128xbf16>, vector<16x128xf32> -> vector<16x128xf32>
    %c3 = arith.constant 3 : index
    %c0_14 = arith.constant 0 : index
    %30 = vector.load %arg2[%c3, %c0_14] : memref<8x128xf32, #tpu.memory_space<vmem>>, vector<1x128xf32>
    %31 = vector.broadcast %30 : vector<1x128xf32> to vector<16x128xf32>
    %32 = arith.addf %29, %31 : vector<16x128xf32>
    %c0_15 = arith.constant 0 : index
    %c0_16 = arith.constant 0 : index
    %33 = vector.load %arg5[%c0_15, %c0_16] : memref<16x128xf32, #tpu.memory_space<vmem>>, vector<16x128xf32>
    tpu.vector_store %arg5[%c0_15, %c0_16], %32 {strides = array<i32>} : memref<16x128xf32, #tpu.memory_space<vmem>>, vector<16x128xf32>,
    return
  }
  func.func @transform_0(%arg0: i32) -> (i32, i32) {
    %c0_i32 = arith.constant 0 : i32
    %c0_i32_0 = arith.constant 0 : i32
    return %arg0, %c0_i32 : i32, i32
  }
  func.func @transform_1(%arg0: i32) -> (i32, i32) {
    %c0_i32 = arith.constant 0 : i32
    %c0_i32_0 = arith.constant 0 : i32
    %c0_i32_1 = arith.constant 0 : i32
    return %c0_i32, %c0_i32_0 : i32, i32
  }
  func.func @transform_2(%arg0: i32) -> (i32, i32) {
    %c0_i32 = arith.constant 0 : i32
    %c0_i32_0 = arith.constant 0 : i32
    %c0_i32_1 = arith.constant 0 : i32
    return %c0_i32, %c0_i32_0 : i32, i32
  }
  func.func @transform_3(%arg0: i32) -> (i32, i32) {
    %c0_i32 = arith.constant 0 : i32
    %c0_i32_0 = arith.constant 0 : i32
    %c0_i32_1 = arith.constant 0 : i32
    return %c0_i32, %c0_i32_0 : i32, i32
  }
  func.func @transform_4(%arg0: i32) -> (i32, i32) {
    %c0_i32 = arith.constant 0 : i32
    %c0_i32_0 = arith.constant 0 : i32
    return %arg0, %c0_i32 : i32, i32
  }
}

</mosaic_0001>

<llo_original>
// kernel: mlp_temporal_encoder_block.1
$region0: #{mlp_temporal_encoder_block.1}
  #allocation0 [shape = 'u32[]', space=smem, size = 0x4, offset = 0x4, fixed_abs, tag = 'smem constant byte address 0x4 - core index']
  #allocation1 [shape = 'u32[144,128]{1,0:T(1,128)}', space=vmem, size = 0x12000, scoped, tag = 'internal scratch']
  %s0 = inlined_call_operand.vmem [shape: f32[16,128], index: 0, kind: input, shape index: {}]
  %s1 = inlined_call_operand.vmem [shape: f32[8,128], index: 1, kind: input, shape index: {}]
  %s2 = inlined_call_operand.vmem [shape: bf16[128,128], index: 2, kind: input, shape index: {}]
  %s3 = inlined_call_operand.vmem [shape: bf16[128,128], index: 3, kind: input, shape index: {}]
  %s4 = inlined_call_operand.vmem [shape: f32[16,128], index: 4, kind: output, shape index: {}]
  %s5 = sld [smem:[#allocation0]]
  $region26: #{mlp_temporal_encoder_block.1} parent=0
    _
  %s7 = ssub.s32 1, %s5
  %s8 = scalar_select 0, %s7, %s5
  // Predicated region
  $region2: #{mlp_temporal_encoder_block.1} parent=0 // pred_check
    _
  $region3: #{mlp_temporal_encoder_block.1} parent=0 // pred_check_branch
    %10 = sbr.rel (0) target = $region5
  $region4: #{mlp_temporal_encoder_block.1} parent=0 // pred_region
    _
  $region5: #{mlp_temporal_encoder_block.1} parent=0 // pred_fallthru
    _
  // Predicated region
  $region6: #{mlp_temporal_encoder_block.1} parent=0 // pred_check
    _
  $region7: #{mlp_temporal_encoder_block.1} parent=0 // pred_check_branch
    %12 = sbr.rel (0) target = $region9
  $region8: #{mlp_temporal_encoder_block.1} parent=0 // pred_region
    _
  $region9: #{mlp_temporal_encoder_block.1} parent=0 // pred_fallthru
    _
  // Predicated region
  $region10: #{mlp_temporal_encoder_block.1} parent=0 // pred_check
    _
  $region11: #{mlp_temporal_encoder_block.1} parent=0 // pred_check_branch
    %14 = sbr.rel (0) target = $region13
  $region12: #{mlp_temporal_encoder_block.1} parent=0 // pred_region
    _
  $region13: #{mlp_temporal_encoder_block.1} parent=0 // pred_fallthru
    _
  // Predicated region
  $region14: #{mlp_temporal_encoder_block.1} parent=0 // pred_check
    _
  $region15: #{mlp_temporal_encoder_block.1} parent=0 // pred_check_branch
    %16 = sbr.rel (0) target = $region17
  $region16: #{mlp_temporal_encoder_block.1} parent=0 // pred_region
    _
  $region17: #{mlp_temporal_encoder_block.1} parent=0 // pred_fallthru
    _
  %v18 = vld [vmem:[%s0] sm:$0xff]
  %v19 = vld [vmem:[%s0 + $0x8] sm:$0xff]
  %v20 = vld [vmem:[%s1] sm:$0x1]
  %v21 = vlaneseq
  %v22 = vshrl.u32 %v21, 7
  %v23 = vsub.s32 0, %v22
  %v24 = vrot.slane %v20, %v23
  %v25 = vmul.f32 %v18, %v24
  %v26 = vmul.f32 %v19, %v24
  %v27 = vld [vmem:[%s1 + $0x1] sm:$0x1]
  %v28 = vlaneseq
  %v29 = vshrl.u32 %v28, 7
  %v30 = vsub.s32 0, %v29
  %v31 = vrot.slane %v27, %v30
  %v32 = vadd.f32 %v25, %v31
  %v33 = vadd.f32 %v26, %v31
  %v34 = vsub.f32 0.0, %v32
  %v35 = vsub.f32 0.0, %v33
  %v36 = vmul.f32 %v34, 1.442695
  %v37 = vpow.pop %v36
  %v38 = vmul.f32 %v35, 1.442695
  %v39 = vpow.pop %v38
  %v40 = vadd.f32 %v37, 1.0
  %v41 = vadd.f32 %v39, 1.0
  %v42 = vrcp.pop %v40
  %v43 = vrcp.pop %v41
  %v44 = vmul.f32 %v32, %v42
  %v45 = vmul.f32 %v33, %v43
  %v46 = vpack.c.bf16 %v45, %v44
  %v47 = vld [vmem:[%s2] sm:$0xf]
  %v48 = vld [vmem:[%s2 + $0x4] sm:$0xf]
  %v49 = vld [vmem:[%s2 + $0x8] sm:$0xf]
  %v50 = vld [vmem:[%s2 + $0xc] sm:$0xf]
  %v51 = vld [vmem:[%s2 + $0x10] sm:$0xf]
  %v52 = vld [vmem:[%s2 + $0x14] sm:$0xf]
  %v53 = vld [vmem:[%s2 + $0x18] sm:$0xf]
  %v54 = vld [vmem:[%s2 + $0x1c] sm:$0xf]
  %v55 = vld [vmem:[%s2 + $0x20] sm:$0xf]
  %v56 = vld [vmem:[%s2 + $0x24] sm:$0xf]
  %v57 = vld [vmem:[%s2 + $0x28] sm:$0xf]
  %v58 = vld [vmem:[%s2 + $0x2c] sm:$0xf]
  %v59 = vld [vmem:[%s2 + $0x30] sm:$0xf]
  %v60 = vld [vmem:[%s2 + $0x34] sm:$0xf]
  %v61 = vld [vmem:[%s2 + $0x38] sm:$0xf]
  %v62 = vld [vmem:[%s2 + $0x3c] sm:$0xf]
  %v63 = vld [vmem:[%s1 + $0x2] sm:$0x1]
  %v64 = vlaneseq
  %v65 = vshrl.u32 %v64, 7
  %v66 = vsub.s32 0, %v65
  %v67 = vrot.slane %v63, %v66
  %v84 = vunpack.c.l.b16 %v47
  %v85 = vunpack.c.l.b16 %v48
  %v86 = vunpack.c.l.b16 %v49
  %v87 = vunpack.c.l.b16 %v50
  %v88 = vunpack.c.l.b16 %v51
  %v89 = vunpack.c.l.b16 %v52
  %v90 = vunpack.c.l.b16 %v53
  %v91 = vunpack.c.l.b16 %v54
  %v92 = vunpack.c.l.b16 %v55
  %v93 = vunpack.c.l.b16 %v56
  %v94 = vunpack.c.l.b16 %v57
  %v95 = vunpack.c.l.b16 %v58
  %v96 = vunpack.c.l.b16 %v59
  %v97 = vunpack.c.l.b16 %v60
  %v98 = vunpack.c.l.b16 %v61
  %v99 = vunpack.c.l.b16 %v62
  %v100 = vpack.c.b16 %v85, %v84
  %v101 = vpack.c.b16 %v87, %v86
  %v102 = vpack.c.b16 %v89, %v88
  %v103 = vpack.c.b16 %v91, %v90
  %v104 = vpack.c.b16 %v93, %v92
  %v105 = vpack.c.b16 %v95, %v94
  %v106 = vpack.c.b16 %v97, %v96
  %v107 = vpack.c.b16 %v99, %v98
  %116 = vmatprep.subr.bf16.mxu0 0
  %117 = vmatpush1.bf16.msra.mxu0 %v100
  %118 = vmatprep.subr.bf16.mxu0 0
  %119 = vmatpush1.bf16.msra.mxu0 %v101
  %120 = vmatprep.subr.bf16.mxu0 0
  %121 = vmatpush1.bf16.msra.mxu0 %v102
  %122 = vmatprep.subr.bf16.mxu0 0
  %123 = vmatpush1.bf16.msra.mxu0 %v103
  %124 = vmatprep.subr.bf16.mxu0 0
  %125 = vmatpush1.bf16.msra.mxu0 %v104
  %126 = vmatprep.subr.bf16.mxu0 0
  %127 = vmatpush1.bf16.msra.mxu0 %v105
  %128 = vmatprep.subr.bf16.mxu0 0
  %129 = vmatpush1.bf16.msra.mxu0 %v106
  %130 = vmatprep.subr.bf16.mxu0 0
  %131 = vmatpush1.bf16.msra.mxu0 %v107
  %132 = vmatprep.subr.bf16.mxu0 0
  %133 = vmatpush1.bf16.msra.mxu0 0
  %134 = vmatprep.subr.bf16.mxu0 0
  %135 = vmatpush1.bf16.msra.mxu0 0
  %136 = vmatprep.subr.bf16.mxu0 0
  %137 = vmatpush1.bf16.msra.mxu0 0
  %138 = vmatprep.subr.bf16.mxu0 0
  %139 = vmatpush1.bf16.msra.mxu0 0
  %140 = vmatprep.subr.bf16.mxu0 0
  %141 = vmatpush1.bf16.msra.mxu0 0
  %142 = vmatprep.subr.bf16.mxu0 0
  %143 = vmatpush1.bf16.msra.mxu0 0
  %144 = vmatprep.subr.bf16.mxu0 0
  %145 = vmatpush1.bf16.msra.mxu0 0
  %146 = vmatprep.subr.bf16.mxu0 0
  %147 = vmatpush1.bf16.msra.mxu0 0
  %148 = vmatprep.mubr.bf16.mxu0 0
  %149 = vmatmul.mubr.bf16.gmra.mrb[0].mxu0 %v46
  %v150 = vpop.f32.mrb[0].mxu0
  %v151 = vadd.f32 %v67, %v150
  %v152 = vpop.f32.mrb[0].mxu0
  %v153 = vpop.f32.mrb[0].mxu0
  %v154 = vadd.f32 %v67, %v153
  %v155 = vpop.f32.mrb[0].mxu0
  %156 = vdwg.mxu0
  %v157 = vsub.f32 0.0, %v151
  %v158 = vsub.f32 0.0, %v154
  %v159 = vmul.f32 %v157, 1.442695
  %v160 = vpow.pop %v159
  %v161 = vmul.f32 %v158, 1.442695
  %v162 = vpow.pop %v161
  %v163 = vadd.f32 %v160, 1.0
  %v164 = vadd.f32 %v162, 1.0
  %v165 = vrcp.pop %v163
  %v166 = vrcp.pop %v164
  %v167 = vmul.f32 %v151, %v165
  %v168 = vmul.f32 %v154, %v166
  %v169 = vpack.c.bf16 %v168, %v167
  %v170 = vld [vmem:[%s3] sm:$0xf]
  %v171 = vld [vmem:[%s3 + $0x4] sm:$0xf]
  %v172 = vld [vmem:[%s3 + $0x8] sm:$0xf]
  %v173 = vld [vmem:[%s3 + $0xc] sm:$0xf]
  %v174 = vld [vmem:[%s3 + $0x10] sm:$0xf]
  %v175 = vld [vmem:[%s3 + $0x14] sm:$0xf]
  %v176 = vld [vmem:[%s3 + $0x18] sm:$0xf]
  %v177 = vld [vmem:[%s3 + $0x1c] sm:$0xf]
  %v178 = vld [vmem:[%s3 + $0x20] sm:$0xf]
  %v179 = vld [vmem:[%s3 + $0x24] sm:$0xf]
  %v180 = vld [vmem:[%s3 + $0x28] sm:$0xf]
  %v181 = vld [vmem:[%s3 + $0x2c] sm:$0xf]
  %v182 = vld [vmem:[%s3 + $0x30] sm:$0xf]
  %v183 = vld [vmem:[%s3 + $0x34] sm:$0xf]
  %v184 = vld [vmem:[%s3 + $0x38] sm:$0xf]
  %v185 = vld [vmem:[%s3 + $0x3c] sm:$0xf]
  %v186 = vld [vmem:[%s1 + $0x3] sm:$0x1]
  %v187 = vlaneseq
  %v188 = vshrl.u32 %v187, 7
  %v189 = vsub.s32 0, %v188
  %v190 = vrot.slane %v186, %v189
  %v207 = vunpack.c.l.b16 %v170
  %v208 = vunpack.c.l.b16 %v171
  %v209 = vunpack.c.l.b16 %v172
  %v210 = vunpack.c.l.b16 %v173
  %v211 = vunpack.c.l.b16 %v174
  %v212 = vunpack.c.l.b16 %v175
  %v213 = vunpack.c.l.b16 %v176
  %v214 = vunpack.c.l.b16 %v177
  %v215 = vunpack.c.l.b16 %v178
  %v216 = vunpack.c.l.b16 %v179
  %v217 = vunpack.c.l.b16 %v180
  %v218 = vunpack.c.l.b16 %v181
  %v219 = vunpack.c.l.b16 %v182
  %v220 = vunpack.c.l.b16 %v183
  %v221 = vunpack.c.l.b16 %v184
  %v222 = vunpack.c.l.b16 %v185
  %v223 = vpack.c.b16 %v208, %v207
  %v224 = vpack.c.b16 %v210, %v209
  %v225 = vpack.c.b16 %v212, %v211
  %v226 = vpack.c.b16 %v214, %v213
  %v227 = vpack.c.b16 %v216, %v215
  %v228 = vpack.c.b16 %v218, %v217
  %v229 = vpack.c.b16 %v220, %v219
  %v230 = vpack.c.b16 %v222, %v221
  %239 = vmatprep.subr.bf16.mxu0 0
  %240 = vmatpush1.bf16.msra.mxu0 %v223
  %241 = vmatprep.subr.bf16.mxu0 0
  %242 = vmatpush1.bf16.msra.mxu0 %v224
  %243 = vmatprep.subr.bf16.mxu0 0
  %244 = vmatpush1.bf16.msra.mxu0 %v225
  %245 = vmatprep.subr.bf16.mxu0 0
  %246 = vmatpush1.bf16.msra.mxu0 %v226
  %247 = vmatprep.subr.bf16.mxu0 0
  %248 = vmatpush1.bf16.msra.mxu0 %v227
  %249 = vmatprep.subr.bf16.mxu0 0
  %250 = vmatpush1.bf16.msra.mxu0 %v228
  %251 = vmatprep.subr.bf16.mxu0 0
  %252 = vmatpush1.bf16.msra.mxu0 %v229
  %253 = vmatprep.subr.bf16.mxu0 0
  %254 = vmatpush1.bf16.msra.mxu0 %v230
  %255 = vmatprep.subr.bf16.mxu0 0
  %256 = vmatpush1.bf16.msra.mxu0 0
  %257 = vmatprep.subr.bf16.mxu0 0
  %258 = vmatpush1.bf16.msra.mxu0 0
  %259 = vmatprep.subr.bf16.mxu0 0
  %260 = vmatpush1.bf16.msra.mxu0 0
  %261 = vmatprep.subr.bf16.mxu0 0
  %262 = vmatpush1.bf16.msra.mxu0 0
  %263 = vmatprep.subr.bf16.mxu0 0
  %264 = vmatpush1.bf16.msra.mxu0 0
  %265 = vmatprep.subr.bf16.mxu0 0
  %266 = vmatpush1.bf16.msra.mxu0 0
  %267 = vmatprep.subr.bf16.mxu0 0
  %268 = vmatpush1.bf16.msra.mxu0 0
  %269 = vmatprep.subr.bf16.mxu0 0
  %270 = vmatpush1.bf16.msra.mxu0 0
  %271 = vmatprep.mubr.bf16.mxu0 0
  %272 = vmatmul.mubr.bf16.gmra.mrb[0].mxu0 %v169
  %v273 = vpop.f32.mrb[0].mxu0
  %v274 = vadd.f32 %v190, %v273
  %v275 = vpop.f32.mrb[0].mxu0
  %v276 = vpop.f32.mrb[0].mxu0
  %v277 = vadd.f32 %v190, %v276
  %v278 = vpop.f32.mrb[0].mxu0
  %279 = vdwg.mxu0
  %280 = vst [vmem:[%s4] sm:$0xff] %v274
  %281 = vst [vmem:[%s4 + $0x8] sm:$0xff] %v277
  // Predicated region
  $region18: #{mlp_temporal_encoder_block.1} parent=0 // pred_check
    _
  $region19: #{mlp_temporal_encoder_block.1} parent=0 // pred_check_branch
    %283 = sbr.rel (0) target = $region21
  $region20: #{mlp_temporal_encoder_block.1} parent=0 // pred_region
    _
  $region21: #{mlp_temporal_encoder_block.1} parent=0 // pred_fallthru
    _
  // Predicated region
  $region22: #{mlp_temporal_encoder_block.1} parent=0 // pred_check
    _
  $region23: #{mlp_temporal_encoder_block.1} parent=0 // pred_check_branch
    %285 = sbr.rel (0) target = $region25
  $region24: #{mlp_temporal_encoder_block.1} parent=0 // pred_region
    _
  $region25: #{mlp_temporal_encoder_block.1} parent=0 // pred_fallthru
    _

</llo_original>
